<compile_context>
chip_gen: v7x
topology: tpu7x:2x2x1
jax: 0.10.0
libtpu: 0.0.40
codegen_flags: <defaults>
</compile_context>

<pallas_src>
import functools
import math

import jax
import jax.numpy as jnp
from jax import lax
from jax.experimental import pallas as pl
from jax.experimental.pallas import tpu as pltpu

_NEG_BIG = -1e30  # large finite negative instead of -inf (avoids inf-inf NaNs)


def _layer_norm(y, w, b, eps):
    mu = jnp.mean(y, axis=-1, keepdims=True)
    var = jnp.mean(jnp.square(y - mu), axis=-1, keepdims=True)
    return (y - mu) * lax.rsqrt(var + eps) * w + b


# --------------------------------------------------------------------------- #
# Kernel 1: LN1 + K/V projection per key tile, head-split bf16 cache to HBM.  #
# --------------------------------------------------------------------------- #
def _kv_proj_kernel(eps, x_ref, ln1w_ref, ln1b_ref, wk_ref, bk_ref, wv_ref, bv_ref,
                    k_ref, v_ref):
    nheads = k_ref.shape[1]
    TK, H = x_ref.shape[1], x_ref.shape[2]
    hd = H // nheads

    xk = x_ref[0].astype(jnp.float32)                                    # (TK, H)
    n1 = _layer_norm(xk, ln1w_ref[...], ln1b_ref[...], eps).astype(jnp.bfloat16)
    k = jnp.dot(n1, wk_ref[...], preferred_element_type=jnp.float32) + bk_ref[...]
    v = jnp.dot(n1, wv_ref[...], preferred_element_type=jnp.float32) + bv_ref[...]
    k_ref[0] = k.astype(jnp.bfloat16).reshape(TK, nheads, hd).transpose(1, 0, 2)
    v_ref[0] = v.astype(jnp.bfloat16).reshape(TK, nheads, hd).transpose(1, 0, 2)


# --------------------------------------------------------------------------- #
# Kernel 2: flash-style causal attention (online softmax over key tiles),     #
# output projection, residual, LN2 + MLP, residual.                           #
# --------------------------------------------------------------------------- #
def _attn_mlp_kernel(eps, x_ref, k_ref, v_ref,
                     ln1w_ref, ln1b_ref, wq_ref, bq_ref, wo_ref, bo_ref,
                     ln2w_ref, ln2b_ref, w1_ref, b1_ref, w2_ref, b2_ref,
                     o_ref,
                     q_scr, m_scr, l_scr, acc_scr):
    qi = pl.program_id(1)
    kj = pl.program_id(2)
    nheads, TK, hd = k_ref.shape[1], k_ref.shape[2], k_ref.shape[3]
    TQ, H = x_ref.shape[1], x_ref.shape[2]

    # ---- per-(b, qi) init: Q projection + online-softmax state ----
    @pl.when(kj == 0)
    def _init():
        xq = x_ref[0].astype(jnp.float32)                                # (TQ, H)
        n1q = _layer_norm(xq, ln1w_ref[...], ln1b_ref[...], eps).astype(jnp.bfloat16)
        # 1/sqrt(hd) is folded into wq/bq host-side.
        q = jnp.dot(n1q, wq_ref[...], preferred_element_type=jnp.float32) + bq_ref[...]
        q_scr[...] = q.astype(jnp.bfloat16).reshape(TQ, nheads, hd).transpose(1, 0, 2)
        m_scr[...] = jnp.full_like(m_scr, _NEG_BIG)
        l_scr[...] = jnp.zeros_like(l_scr)
        acc_scr[...] = jnp.zeros_like(acc_scr)

    def attend(apply_mask):
        kh = k_ref[0]                                                    # (nh, TK, hd) bf16
        vh = v_ref[0]
        s = jnp.einsum('hqd,hkd->hqk', q_scr[...], kh,
                       preferred_element_type=jnp.float32)               # (nh, TQ, TK) f32
        if apply_mask:
            # Diagonal tile only (TQ == TK): mask key pos > query pos.
            row = lax.broadcasted_iota(jnp.int32, (1, TQ, TK), 1)
            col = lax.broadcasted_iota(jnp.int32, (1, TQ, TK), 2)
            s = jnp.where(col > row, _NEG_BIG, s)
        m_prev = m_scr[...]
        m_new = jnp.maximum(m_prev, jnp.max(s, axis=-1, keepdims=True))
        alpha = jnp.exp(m_prev - m_new)
        p = jnp.exp(s - m_new)
        l_scr[...] = alpha * l_scr[...] + jnp.sum(p, axis=-1, keepdims=True)
        acc_scr[...] = alpha * acc_scr[...] + jnp.einsum(
            'hqk,hkd->hqd', p.astype(jnp.bfloat16), vh,
            preferred_element_type=jnp.float32)
        m_scr[...] = m_new

    # ---- strictly-below-diagonal key tiles: no mask needed ----
    @pl.when(kj < qi)
    def _off_diag():
        attend(apply_mask=False)

    # ---- diagonal key tile: mask, finalize attention, then MLP ----
    @pl.when(kj == qi)
    def _diag_finalize():
        attend(apply_mask=True)

        inv = pl.reciprocal(l_scr[...], approx=True)                     # (nh, TQ, 1)
        o = acc_scr[...] * inv                                           # normalize once
        attn = o.transpose(1, 0, 2).reshape(TQ, H).astype(jnp.bfloat16)  # merge heads
        attn = jnp.dot(attn, wo_ref[...], preferred_element_type=jnp.float32) + bo_ref[...]

        x1 = x_ref[0].astype(jnp.float32) + attn                         # residual 1 (f32)

        n2 = _layer_norm(x1, ln2w_ref[...], ln2b_ref[...], eps).astype(jnp.bfloat16)
        h1 = jnp.dot(n2, w1_ref[...], preferred_element_type=jnp.float32) + b1_ref[...]
        # exact (erf) GELU, matching PyTorch nn.GELU() default
        g = (0.5 * h1 * (1.0 + lax.erf(h1 * (1.0 / math.sqrt(2.0))))).astype(jnp.bfloat16)
        h2 = jnp.dot(g, w2_ref[...], preferred_element_type=jnp.float32) + b2_ref[...]

        o_ref[0] = (x1 + h2).astype(o_ref.dtype)                         # residual 2
    # key tiles with kj > qi do nothing at all (causal skip).


def _vmem_limit_bytes():
    # ~80% of physical VMEM: ≈51 MiB on v7x (64 MiB), ≈102 MiB on v5e/v6e (128 MiB).
    try:
        return int(pltpu.get_tpu_info().vmem_capacity_bytes * 4 // 5)
    except Exception:
        return 64 * 1024 * 1024


def _tile_len(S, cap=256):
    """Largest divisor of S that is a multiple of 8 and <= cap."""
    for t in range(min(cap, S), 7, -1):
        if S % t == 0 and t % 8 == 0:
            return t
    # TODO(synk): masked tail tiles for sequence lengths that are not multiples of 8.
    return S


def transformer_layer(x, params, nheads, eps=1e-5):
    B, S, H = x.shape
    assert H % nheads == 0
    hd = H // nheads
    scale = 1.0 / math.sqrt(hd)
    bf16 = jnp.bfloat16

    T = _tile_len(S)          # query tile == key tile (diagonal-only masking)
    n_t = S // T

    wqkv = params['wqkv_t']   # (H, 3H), y = x @ W layout
    bqkv = params['bqkv']     # (1, 3H)
    # split q/k/v (avoids lane slicing in-kernel); fold 1/sqrt(hd) into Q proj
    wq = (wqkv[:, 0:H] * scale).astype(bf16)
    wk = wqkv[:, H:2 * H].astype(bf16)
    wv = wqkv[:, 2 * H:3 * H].astype(bf16)
    bq = bqkv[:, 0:H] * scale
    bk = bqkv[:, H:2 * H]
    bv = bqkv[:, 2 * H:3 * H]

    vmem_limit = _vmem_limit_bytes()

    # Single-buffered specs for constant-index weight/bias operands.
    def const2(p):
        return pl.BlockSpec(p.shape, lambda b, kt: (0, 0), pipeline_mode=pl.Buffered(1))

    def const3(p):
        return pl.BlockSpec(p.shape, lambda b, qi, kj: (0, 0), pipeline_mode=pl.Buffered(1))

    # ------------------ kernel 1: K/V projection to HBM cache ------------------ #
    kv_params = [params['ln1_w'], params['ln1_b'], wk, bk, wv, bv]
    kv_in_specs = [pl.BlockSpec((1, T, H), lambda b, kt: (b, kt, 0))]
    kv_in_specs += [const2(p) for p in kv_params]

    cache_shape = jax.ShapeDtypeStruct((B * n_t, nheads, T, hd), bf16)
    cache_out_spec = pl.BlockSpec((1, nheads, T, hd),
                                  lambda b, kt: (b * n_t + kt, 0, 0, 0))

    k_cache, v_cache = pl.pallas_call(
        functools.partial(_kv_proj_kernel, eps),
        out_shape=(cache_shape, cache_shape),
        grid_spec=pltpu.PrefetchScalarGridSpec(
            num_scalar_prefetch=0,
            grid=(B, n_t),
            in_specs=kv_in_specs,
            out_specs=(cache_out_spec, cache_out_spec),
        ),
        compiler_params=pltpu.CompilerParams(
            dimension_semantics=("parallel", "parallel"),
            vmem_limit_bytes=vmem_limit,
        ),
    )(x, *kv_params)

    # ------------- kernel 2: flash attention + out-proj + MLP ------------- #
    attn_params = [
        params['ln1_w'], params['ln1_b'], wq, bq,
        params['wo_t'].astype(bf16), params['bo'],
        params['ln2_w'], params['ln2_b'],
        params['w1_t'].astype(bf16), params['b1'],
        params['w2_t'].astype(bf16), params['b2'],
    ]

    # Clamp the key-tile index to the diagonal: tiles past it are never used,
    # so no new DMA is issued for causally-skipped grid steps.
    def kv_idx(b, qi, kj):
        return (b * n_t + jnp.minimum(kj, qi), 0, 0, 0)

    in_specs = [
        pl.BlockSpec((1, T, H), lambda b, qi, kj: (b, qi, 0)),   # query tile (resident over kj)
        pl.BlockSpec((1, nheads, T, hd), kv_idx),                # K tile
        pl.BlockSpec((1, nheads, T, hd), kv_idx),                # V tile
    ]
    in_specs += [const3(p) for p in attn_params]

    return pl.pallas_call(
        functools.partial(_attn_mlp_kernel, eps),
        out_shape=jax.ShapeDtypeStruct((B, S, H), x.dtype),
        grid_spec=pltpu.PrefetchScalarGridSpec(
            num_scalar_prefetch=0,
            grid=(B, n_t, n_t),
            in_specs=in_specs,
            out_specs=pl.BlockSpec((1, T, H), lambda b, qi, kj: (b, qi, 0)),
            scratch_shapes=[
                pltpu.VMEM((nheads, T, hd), bf16),        # Q (head-split)
                pltpu.VMEM((nheads, T, 1), jnp.float32),  # running max  (m)
                pltpu.VMEM((nheads, T, 1), jnp.float32),  # running denom (l)
                pltpu.VMEM((nheads, T, hd), jnp.float32), # output accumulator
            ],
        ),
        compiler_params=pltpu.CompilerParams(
            # batch and query-tile axes parallel (megacore); key-tile axis carries
            # the online-softmax state.
            dimension_semantics=("parallel", "parallel", "arbitrary"),
            vmem_limit_bytes=vmem_limit,
        ),
    )(x, k_cache, v_cache, *attn_params)


def init_params(key, hidden):
    H = hidden
    ks = jax.random.split(key, 8)

    def w(k, shape):
        return 0.02 * jax.random.normal(k, shape, jnp.float32)

    in_proj_w = w(ks[0], (3 * H, H))          # PyTorch layout (out, in)
    in_proj_b = w(ks[1], (1, 3 * H))
    out_proj_w = w(ks[2], (H, H))
    out_proj_b = w(ks[3], (1, H))
    fc1_w = w(ks[4], (4 * H, H))
    fc1_b = w(ks[5], (1, 4 * H))
    fc2_w = w(ks[6], (H, 4 * H))
    fc2_b = w(ks[7], (1, H))

    return dict(
        ln1_w=jnp.ones((1, H), jnp.float32), ln1_b=jnp.zeros((1, H), jnp.float32),
        wqkv_t=in_proj_w.T, bqkv=in_proj_b,
        wo_t=out_proj_w.T, bo=out_proj_b,
        ln2_w=jnp.ones((1, H), jnp.float32), ln2_b=jnp.zeros((1, H), jnp.float32),
        w1_t=fc1_w.T, b1=fc1_b,
        w2_t=fc2_w.T, b2=fc2_b,
    )


def reference(x, p, nheads, eps=1e-5):
    """Pure-JAX f32 reference (mirrors the PyTorch forward in eval mode)."""
    B, S, H = x.shape
    hd = H // nheads

    def ln(y, w, b):
        mu = y.mean(-1, keepdims=True)
        var = ((y - mu) ** 2).mean(-1, keepdims=True)
        return (y - mu) / jnp.sqrt(var + eps) * w + b

    n1 = ln(x, p['ln1_w'][0], p['ln1_b'][0])
    qkv = n1 @ p['wqkv_t'] + p['bqkv'][0]
    q, k, v = jnp.split(qkv, 3, axis=-1)

    def heads(t):
        return t.reshape(B, S, nheads, hd).transpose(0, 2, 1, 3)

    qh, kh, vh = heads(q), heads(k), heads(v)
    s = jnp.einsum('bhqd,bhkd->bhqk', qh, kh) / math.sqrt(hd)
    mask = jnp.triu(jnp.ones((S, S), bool), 1)
    s = jnp.where(mask, -jnp.inf, s)
    a = jax.nn.softmax(s, axis=-1)
    o = jnp.einsum('bhqk,bhkd->bhqd', a, vh).transpose(0, 2, 1, 3).reshape(B, S, H)
    attn = o @ p['wo_t'] + p['bo'][0]
    x1 = x + attn
    n2 = ln(x1, p['ln2_w'][0], p['ln2_b'][0])
    h = jax.nn.gelu(n2 @ p['w1_t'] + p['b1'][0], approximate=False)
    return x1 + (h @ p['w2_t'] + p['b2'][0])


if __name__ == "__main__":
    B, S, H, NHEADS = 2, 8, 32, 4
    key = jax.random.PRNGKey(0)
    kx, kp = jax.random.split(key)
    x = jax.random.normal(kx, (B, S, H), jnp.float32)
    params = init_params(kp, H)

    out = transformer_layer(x, params, NHEADS)
    out = jax.block_until_ready(out)

    ref = reference(x, params, NHEADS)
    assert out.shape == (B, S, H) and out.dtype == jnp.float32
    err = jnp.max(jnp.abs(out - ref))
    # bf16 MXU operands -> looser tolerance vs. the f32 reference
    assert jnp.allclose(out, ref, rtol=2e-2, atol=2e-2), f"max abs err {err}"

    print("KERNEL_OK")
</pallas_src>

<mosaic_0001>
module attributes {stable_mosaic.version = 11 : i64} {
  func.func @_kv_proj_kernel(%arg0: i32, %arg1: i32, %arg2: memref<1x8x32xf32, #tpu.memory_space<vmem>>, %arg3: memref<1x32xf32, #tpu.memory_space<vmem>>, %arg4: memref<1x32xf32, #tpu.memory_space<vmem>>, %arg5: memref<32x32xbf16, #tpu.memory_space<vmem>>, %arg6: memref<1x32xf32, #tpu.memory_space<vmem>>, %arg7: memref<32x32xbf16, #tpu.memory_space<vmem>>, %arg8: memref<1x32xf32, #tpu.memory_space<vmem>>, %arg9: memref<1x4x8x8xbf16, #tpu.memory_space<vmem>>, %arg10: memref<1x4x8x8xbf16, #tpu.memory_space<vmem>>) attributes {dimension_semantics = [#tpu.dimension_semantics<parallel>, #tpu.dimension_semantics<parallel>], iteration_bounds = array<i64: 2, 1>, scalar_prefetch = 0 : i64, scratch_operands = 0 : i64, tpu.core_type = #tpu.core_type<tc>, window_params = [{transform_indices = @transform_0, window_bounds = array<i64: 1, 8, 32>}, {pipeline_mode = #tpu.pipeline_mode<synchronous>, transform_indices = @transform_1, window_bounds = array<i64: 1, 32>}, {pipeline_mode = #tpu.pipeline_mode<synchronous>, transform_indices = @transform_2, window_bounds = array<i64: 1, 32>}, {pipeline_mode = #tpu.pipeline_mode<synchronous>, transform_indices = @transform_3, window_bounds = array<i64: 32, 32>}, {pipeline_mode = #tpu.pipeline_mode<synchronous>, transform_indices = @transform_4, window_bounds = array<i64: 1, 32>}, {pipeline_mode = #tpu.pipeline_mode<synchronous>, transform_indices = @transform_5, window_bounds = array<i64: 32, 32>}, {pipeline_mode = #tpu.pipeline_mode<synchronous>, transform_indices = @transform_6, window_bounds = array<i64: 1, 32>}, {transform_indices = @transform_7, window_bounds = array<i64: 1, 4, 8, 8>}, {transform_indices = @transform_8, window_bounds = array<i64: 1, 4, 8, 8>}]} {
    %c0 = arith.constant 0 : index
    %c0_0 = arith.constant 0 : index
    %c0_1 = arith.constant 0 : index
    %0 = vector.load %arg2[%c0, %c0_0, %c0_1] : memref<1x8x32xf32, #tpu.memory_space<vmem>>, vector<1x8x32xf32>
    %1 = vector.shape_cast %0 : vector<1x8x32xf32> to vector<8x32xf32>
    %c0_2 = arith.constant 0 : index
    %c0_3 = arith.constant 0 : index
    %2 = vector.load %arg3[%c0_2, %c0_3] : memref<1x32xf32, #tpu.memory_space<vmem>>, vector<1x32xf32>
    %c0_4 = arith.constant 0 : index
    %c0_5 = arith.constant 0 : index
    %3 = vector.load %arg4[%c0_4, %c0_5] : memref<1x32xf32, #tpu.memory_space<vmem>>, vector<1x32xf32>
    %cst = arith.constant dense<0.000000e+00> : vector<8xf32>
    %4 = vector.multi_reduction <add>, %1, %cst [1] : vector<8x32xf32> to vector<8xf32>
    %5 = vector.shape_cast %4 : vector<8xf32> to vector<8x1xf32>
    %cst_6 = arith.constant 3.200000e+01 : f32
    %6 = vector.broadcast %cst_6 : f32 to vector<8x1xf32>
    %7 = arith.divf %5, %6 : vector<8x1xf32>
    %8 = vector.broadcast %7 : vector<8x1xf32> to vector<8x32xf32>
    %9 = arith.subf %1, %8 : vector<8x32xf32>
    %10 = arith.mulf %9, %9 : vector<8x32xf32>
    %cst_7 = arith.constant dense<0.000000e+00> : vector<8xf32>
    %11 = vector.multi_reduction <add>, %10, %cst_7 [1] : vector<8x32xf32> to vector<8xf32>
    %12 = vector.shape_cast %11 : vector<8xf32> to vector<8x1xf32>
    %cst_8 = arith.constant 3.200000e+01 : f32
    %13 = vector.broadcast %cst_8 : f32 to vector<8x1xf32>
    %14 = arith.divf %12, %13 : vector<8x1xf32>
    %15 = vector.broadcast %7 : vector<8x1xf32> to vector<8x32xf32>
    %16 = arith.subf %1, %15 : vector<8x32xf32>
    %cst_9 = arith.constant 9.99999974E-6 : f32
    %17 = vector.broadcast %cst_9 : f32 to vector<8x1xf32>
    %18 = arith.addf %14, %17 : vector<8x1xf32>
    %19 = math.rsqrt %18 : vector<8x1xf32>
    %20 = vector.broadcast %19 : vector<8x1xf32> to vector<8x32xf32>
    %21 = arith.mulf %16, %20 : vector<8x32xf32>
    %22 = vector.broadcast %2 : vector<1x32xf32> to vector<8x32xf32>
    %23 = arith.mulf %21, %22 : vector<8x32xf32>
    %24 = vector.broadcast %3 : vector<1x32xf32> to vector<8x32xf32>
    %25 = arith.addf %23, %24 : vector<8x32xf32>
    %26 = arith.truncf %25 : vector<8x32xf32> to vector<8x32xbf16>
    %c0_10 = arith.constant 0 : index
    %c0_11 = arith.constant 0 : index
    %27 = vector.load %arg5[%c0_10, %c0_11] : memref<32x32xbf16, #tpu.memory_space<vmem>>, vector<32x32xbf16>
    %cst_12 = arith.constant dense<0.000000e+00> : vector<8x32xf32>
    %28 = tpu.matmul %26, %27, %cst_12 {dimension_numbers = #tpu.dot_dimension_numbers<[1], [0], [0], [1], [0, 0, 1, 1], [], []>} : vector<8x32xbf16>, vector<32x32xbf16>, vector<8x32xf32> -> vector<8x32xf32>
    %c0_13 = arith.constant 0 : index
    %c0_14 = arith.constant 0 : index
    %29 = vector.load %arg6[%c0_13, %c0_14] : memref<1x32xf32, #tpu.memory_space<vmem>>, vector<1x32xf32>
    %30 = vector.broadcast %29 : vector<1x32xf32> to vector<8x32xf32>
    %31 = arith.addf %28, %30 : vector<8x32xf32>
    %c0_15 = arith.constant 0 : index
    %c0_16 = arith.constant 0 : index
    %32 = vector.load %arg7[%c0_15, %c0_16] : memref<32x32xbf16, #tpu.memory_space<vmem>>, vector<32x32xbf16>
    %cst_17 = arith.constant dense<0.000000e+00> : vector<8x32xf32>
    %33 = tpu.matmul %26, %32, %cst_17 {dimension_numbers = #tpu.dot_dimension_numbers<[1], [0], [0], [1], [0, 0, 1, 1], [], []>} : vector<8x32xbf16>, vector<32x32xbf16>, vector<8x32xf32> -> vector<8x32xf32>
    %c0_18 = arith.constant 0 : index
    %c0_19 = arith.constant 0 : index
    %34 = vector.load %arg8[%c0_18, %c0_19] : memref<1x32xf32, #tpu.memory_space<vmem>>, vector<1x32xf32>
    %35 = vector.broadcast %34 : vector<1x32xf32> to vector<8x32xf32>
    %36 = arith.addf %33, %35 : vector<8x32xf32>
    %37 = arith.truncf %31 : vector<8x32xf32> to vector<8x32xbf16>
    %38 = vector.shape_cast %37 : vector<8x32xbf16> to vector<8x4x8xbf16>
    %39 = tpu.transpose %38, [1, 0, 2] : vector<8x4x8xbf16> -> vector<4x8x8xbf16>
    %c0_20 = arith.constant 0 : index
    %c0_21 = arith.constant 0 : index
    %c0_22 = arith.constant 0 : index
    %c0_23 = arith.constant 0 : index
    %40 = vector.load %arg9[%c0_20, %c0_21, %c0_22, %c0_23] : memref<1x4x8x8xbf16, #tpu.memory_space<vmem>>, vector<1x4x8x8xbf16>
    %41 = vector.shape_cast %40 : vector<1x4x8x8xbf16> to vector<4x8x8xbf16>
    %42 = vector.shape_cast %39 : vector<4x8x8xbf16> to vector<1x4x8x8xbf16>
    tpu.vector_store %arg9[%c0_20, %c0_21, %c0_22, %c0_23], %42 {strides = array<i32>} : memref<1x4x8x8xbf16, #tpu.memory_space<vmem>>, vector<1x4x8x8xbf16>,
    %43 = arith.truncf %36 : vector<8x32xf32> to vector<8x32xbf16>
    %44 = vector.shape_cast %43 : vector<8x32xbf16> to vector<8x4x8xbf16>
    %45 = tpu.transpose %44, [1, 0, 2] : vector<8x4x8xbf16> -> vector<4x8x8xbf16>
    %c0_24 = arith.constant 0 : index
    %c0_25 = arith.constant 0 : index
    %c0_26 = arith.constant 0 : index
    %c0_27 = arith.constant 0 : index
    %46 = vector.load %arg10[%c0_24, %c0_25, %c0_26, %c0_27] : memref<1x4x8x8xbf16, #tpu.memory_space<vmem>>, vector<1x4x8x8xbf16>
    %47 = vector.shape_cast %46 : vector<1x4x8x8xbf16> to vector<4x8x8xbf16>
    %48 = vector.shape_cast %45 : vector<4x8x8xbf16> to vector<1x4x8x8xbf16>
    tpu.vector_store %arg10[%c0_24, %c0_25, %c0_26, %c0_27], %48 {strides = array<i32>} : memref<1x4x8x8xbf16, #tpu.memory_space<vmem>>, vector<1x4x8x8xbf16>,
    return
  }
  func.func @transform_0(%arg0: i32, %arg1: i32) -> (i32, i32, i32) {
    %c0_i32 = arith.constant 0 : i32
    %c0_i32_0 = arith.constant 0 : i32
    return %arg0, %arg1, %c0_i32 : i32, i32, i32
  }
  func.func @transform_1(%arg0: i32, %arg1: i32) -> (i32, i32) {
    %c0_i32 = arith.constant 0 : i32
    %c0_i32_0 = arith.constant 0 : i32
    %c0_i32_1 = arith.constant 0 : i32
    return %c0_i32, %c0_i32_0 : i32, i32
  }
  func.func @transform_2(%arg0: i32, %arg1: i32) -> (i32, i32) {
    %c0_i32 = arith.constant 0 : i32
    %c0_i32_0 = arith.constant 0 : i32
    %c0_i32_1 = arith.constant 0 : i32
    return %c0_i32, %c0_i32_0 : i32, i32
  }
  func.func @transform_3(%arg0: i32, %arg1: i32) -> (i32, i32) {
    %c0_i32 = arith.constant 0 : i32
    %c0_i32_0 = arith.constant 0 : i32
    %c0_i32_1 = arith.constant 0 : i32
    return %c0_i32, %c0_i32_0 : i32, i32
  }
  func.func @transform_4(%arg0: i32, %arg1: i32) -> (i32, i32) {
    %c0_i32 = arith.constant 0 : i32
    %c0_i32_0 = arith.constant 0 : i32
    %c0_i32_1 = arith.constant 0 : i32
    return %c0_i32, %c0_i32_0 : i32, i32
  }
  func.func @transform_5(%arg0: i32, %arg1: i32) -> (i32, i32) {
    %c0_i32 = arith.constant 0 : i32
    %c0_i32_0 = arith.constant 0 : i32
    %c0_i32_1 = arith.constant 0 : i32
    return %c0_i32, %c0_i32_0 : i32, i32
  }
  func.func @transform_6(%arg0: i32, %arg1: i32) -> (i32, i32) {
    %c0_i32 = arith.constant 0 : i32
    %c0_i32_0 = arith.constant 0 : i32
    %c0_i32_1 = arith.constant 0 : i32
    return %c0_i32, %c0_i32_0 : i32, i32
  }
  func.func @transform_7(%arg0: i32, %arg1: i32) -> (i32, i32, i32, i32) {
    %c1_i32 = arith.constant 1 : i32
    %0 = arith.muli %arg0, %c1_i32 : i32
    %1 = arith.addi %0, %arg1 : i32
    %c0_i32 = arith.constant 0 : i32
    %c0_i32_0 = arith.constant 0 : i32
    %c0_i32_1 = arith.constant 0 : i32
    %c0_i32_2 = arith.constant 0 : i32
    return %1, %c0_i32, %c0_i32_0, %c0_i32_1 : i32, i32, i32, i32
  }
  func.func @transform_8(%arg0: i32, %arg1: i32) -> (i32, i32, i32, i32) {
    %c1_i32 = arith.constant 1 : i32
    %0 = arith.muli %arg0, %c1_i32 : i32
    %1 = arith.addi %0, %arg1 : i32
    %c0_i32 = arith.constant 0 : i32
    %c0_i32_0 = arith.constant 0 : i32
    %c0_i32_1 = arith.constant 0 : i32
    %c0_i32_2 = arith.constant 0 : i32
    return %1, %c0_i32, %c0_i32_0, %c0_i32_1 : i32, i32, i32, i32
  }
}

</mosaic_0001>

<llo_original>
// kernel: tpu_custom_call.1
$region0: #{tpu_custom_call.1}
  #allocation0 [shape = 'u32[]', space=smem, size = 0x4, offset = 0x4, fixed_abs, tag = 'smem constant byte address 0x4 - core index']
  #allocation1 [shape = 'u32[144,128]{1,0:T(1,128)}', space=vmem, size = 0x12000, scoped, tag = 'internal scratch']
  %s0 = inlined_call_operand.hbm [shape: f32[2,8,32], index: 0, kind: input, shape index: {}]
  %s1 = inlined_call_operand.hbm [shape: f32[1,32], index: 1, kind: input, shape index: {}]
  %s2 = inlined_call_operand.hbm [shape: f32[1,32], index: 2, kind: input, shape index: {}]
  %s3 = inlined_call_operand.hbm [shape: bf16[32,32], index: 3, kind: input, shape index: {}]
  %s4 = inlined_call_operand.hbm [shape: f32[1,32], index: 4, kind: input, shape index: {}]
  %s5 = inlined_call_operand.hbm [shape: bf16[32,32], index: 5, kind: input, shape index: {}]
  %s6 = inlined_call_operand.hbm [shape: f32[1,32], index: 6, kind: input, shape index: {}]
  %s7 = inlined_call_operand.hbm [shape: bf16[2,4,8,8], index: 7, kind: output, shape index: {0}]
  %s8 = inlined_call_operand.hbm [shape: bf16[2,4,8,8], index: 8, kind: output, shape index: {1}]
  %9 = xla_tuple %s7, %s8
  %s10 = sld [smem:[#allocation0]]
  $region97: #{tpu_custom_call.1} parent=0
    _
  %s12 = ssub.s32 1, %s10
  %s13 = scalar_select 0, %s12, %s10
  $region1: #{tpu_custom_call.1} parent=0
    #allocation2 [shape = 'u8[8192]{0}', space=vmem, size = 0x2000, scoped, tag = 'input window, operand 0']
    #allocation3 [shape = 's32[2]{0}', space=sflag, size = 0x8, scoped, tag = 'scoped memory for tpu_custom_call.1']
    #allocation4 [shape = 's32[2]{0}', space=sflag, size = 0x8, scoped, tag = 'scoped memory for tpu_custom_call.1']
    #allocation5 [shape = 'u8[512]{0}', space=vmem, size = 0x400, scoped, tag = 'input window, operand 1, single buffered']
    #allocation6 [shape = 's32[1]{0}', space=sflag, size = 0x4, scoped, tag = 'scoped memory for tpu_custom_call.1']
    #allocation7 [shape = 'u8[512]{0}', space=vmem, size = 0x400, scoped, tag = 'input window, operand 2, single buffered']
    #allocation8 [shape = 'u8[8192]{0}', space=vmem, size = 0x2000, scoped, tag = 'input window, operand 3, single buffered']
    #allocation9 [shape = 's32[1]{0}', space=sflag, size = 0x4, scoped, tag = 'scoped memory for tpu_custom_call.1']
    #allocation10 [shape = 'u8[512]{0}', space=vmem, size = 0x400, scoped, tag = 'input window, operand 4, single buffered']
    #allocation11 [shape = 'u8[8192]{0}', space=vmem, size = 0x2000, scoped, tag = 'input window, operand 5, single buffered']
    #allocation12 [shape = 's32[1]{0}', space=sflag, size = 0x4, scoped, tag = 'scoped memory for tpu_custom_call.1']
    #allocation13 [shape = 'u8[512]{0}', space=vmem, size = 0x400, scoped, tag = 'input window, operand 6, single buffered']
    #allocation14 [shape = 'u8[16384]{0}', space=vmem, size = 0x4000, scoped, tag = 'output window, operand 0']
    #allocation15 [shape = 'u8[16384]{0}', space=vmem, size = 0x4000, scoped, tag = 'output window, operand 1']
    #allocation16 [shape = 's32[2]{0}', space=sflag, size = 0x8, scoped, tag = 'scoped memory for tpu_custom_call.1']
    %14 = vsyncpa [#allocation3], 0
    %s15 = scalar_lea.sflag [#allocation3], 1
    %16 = vsyncpa %s15, 0
    %17 = vsyncpa [#allocation6], 0
    %18 = vsyncpa [#allocation9], 0
    %19 = vsyncpa [#allocation12], 0
    %20 = vsyncpa [#allocation4], 0
    %s21 = scalar_lea.sflag [#allocation4], 1
    %22 = vsyncpa %s21, 0
    %23 = vsyncpa [#allocation16], 0
    %s24 = scalar_lea.sflag [#allocation16], 1
    %25 = vsyncpa %s24, 0
    loop: start=0, step=1, limit=4
    $region2: #{tpu_custom_call.1} parent=1 // loop_pre_header
      _
    $region3: #{tpu_custom_call.1} parent=1 // loop_header
      %s27 = sphi 0, %s31
      %p28 = scmp.ge.s32.totalorder %s27, 4
      %s34 = sphi 0, %s46
      %s35 = sphi 0, %s42
      %s36 = sphi 0, %s34
      %s37 = sphi 0, %s35
      %s38 = sphi 0, %s36
      %s39 = sphi 0, %s37
      %s51 = sphi 0, %s53
      %s54 = sphi 0, %s51
      %s55 = sphi 0, %s54
      %s71 = sphi 0, %s55
      %s75 = sphi 0, %s75
      %s77 = sphi 0, %s75
      %s78 = sphi 0, %s77
      %s92 = sphi 0, %s78
      %s96 = sphi 0, %s96
      %s98 = sphi 0, %s96
      %s99 = sphi 0, %s98
      %s113 = sphi 0, %s99
      %s117 = sphi 0, %s117
      %s119 = sphi 0, %s117
      %s120 = sphi 0, %s119
      %s134 = sphi 0, %s120
      %s138 = sphi 0, %s138
      %s140 = sphi 0, %s138
      %s141 = sphi 0, %s140
      %s155 = sphi 0, %s141
      %s159 = sphi 0, %s159
      %s161 = sphi 0, %s159
      %s162 = sphi 0, %s161
      %s176 = sphi 0, %s162
      %s180 = sphi 0, %s180
      %s182 = sphi 0, %s180
      %s183 = sphi 0, %s182
      %s197 = sphi 0, %s183
      %s205 = sphi 0, %s207
      %s208 = sphi 0, %s205
      %s209 = sphi 0, %s208
      %s225 = sphi 0, %s209
      %s233 = sphi 0, %s235
      %s236 = sphi 0, %s233
      %s237 = sphi 0, %s236
      %s253 = sphi 0, %s237
    $region4: #{tpu_custom_call.1} parent=1 // loop_header_branch
      %30 = sbr.rel (%p28) target = $region8
    $region5: #{tpu_custom_call.1} parent=1 // loop_body
      %s32 = ssub.s32 %s27, 1
      %s33 = ssub.s32 %s27, 2
      %s40 = sadd.s32 1, %s35
      %p41 = scmp.ge.s32.totalorder %s40, 1
      %s42 = scalar_select %p41, 0, %s40
      %s43 = sadd.s32 1, %s34
      %s44 = scalar_select %p41, %s43, %s34
      %p45 = scmp.ge.s32.totalorder %s44, 2
      %s46 = scalar_select %p45, 0, %s44
      %s47 = ssub.s32 %s34, %s46
      %s48 = ssub.s32 %s35, %s42
      %s49 = sor.u32 %s47, %s48
      %p50 = scmp.eq.s32.totalorder %s49, 0
      %s52 = sadd.s32 %s51, 1
      %s53 = scalar_select %p50, %s51, %s52
      %p56 = pneg %p50
      %p57 = scmp.eq.s32.totalorder %s27, 1
      %p58 = por %p56, %p57
      %p59 = scmp.ne.s32.totalorder %s51, %s54
      %p60 = scmp.eq.s32.totalorder %s27, 0
      %p61 = por %p59, %p60
      %p62 = scmp.ne.s32.totalorder %s51, %s54
      %p63 = scmp.eq.s32.totalorder %s32, 1
      %p64 = por %p62, %p63
      %p65 = scmp.ne.s32.totalorder %s54, %s55
      %p66 = scmp.eq.s32.totalorder %s32, 0
      %p67 = por %p65, %p66
      %p68 = scmp.ne.s32.totalorder %s54, %s55
      %p69 = scmp.eq.s32.totalorder %s33, 1
      %p70 = por %p68, %p69
      %p72 = scmp.ne.s32.totalorder %s55, %s71
      %p73 = scmp.eq.s32.totalorder %s33, 0
      %p74 = por %p72, %p73
      %s76 = sadd.s32 %s75, 1
      %p79 = scmp.eq.s32.totalorder %s27, 1
      %p80 = scmp.ne.s32.totalorder %s75, %s77
      %p81 = scmp.eq.s32.totalorder %s27, 0
      %p82 = por %p80, %p81
      %p83 = scmp.ne.s32.totalorder %s75, %s77
      %p84 = scmp.eq.s32.totalorder %s32, 1
      %p85 = por %p83, %p84
      %p86 = scmp.ne.s32.totalorder %s77, %s78
      %p87 = scmp.eq.s32.totalorder %s32, 0
      %p88 = por %p86, %p87
      %p89 = scmp.ne.s32.totalorder %s77, %s78
      %p90 = scmp.eq.s32.totalorder %s33, 1
      %p91 = por %p89, %p90
      %p93 = scmp.ne.s32.totalorder %s78, %s92
      %p94 = scmp.eq.s32.totalorder %s33, 0
      %p95 = por %p93, %p94
      %s97 = sadd.s32 %s96, 1
      %p100 = scmp.eq.s32.totalorder %s27, 1
      %p101 = scmp.ne.s32.totalorder %s96, %s98
      %p102 = scmp.eq.s32.totalorder %s27, 0
      %p103 = por %p101, %p102
      %p104 = scmp.ne.s32.totalorder %s96, %s98
      %p105 = scmp.eq.s32.totalorder %s32, 1
      %p106 = por %p104, %p105
      %p107 = scmp.ne.s32.totalorder %s98, %s99
      %p108 = scmp.eq.s32.totalorder %s32, 0
      %p109 = por %p107, %p108
      %p110 = scmp.ne.s32.totalorder %s98, %s99
      %p111 = scmp.eq.s32.totalorder %s33, 1
      %p112 = por %p110, %p111
      %p114 = scmp.ne.s32.totalorder %s99, %s113
      %p115 = scmp.eq.s32.totalorder %s33, 0
      %p116 = por %p114, %p115
      %s118 = sadd.s32 %s117, 1
      %p121 = scmp.eq.s32.totalorder %s27, 1
      %p122 = scmp.ne.s32.totalorder %s117, %s119
      %p123 = scmp.eq.s32.totalorder %s27, 0
      %p124 = por %p122, %p123
      %p125 = scmp.ne.s32.totalorder %s117, %s119
      %p126 = scmp.eq.s32.totalorder %s32, 1
      %p127 = por %p125, %p126
      %p128 = scmp.ne.s32.totalorder %s119, %s120
      %p129 = scmp.eq.s32.totalorder %s32, 0
      %p130 = por %p128, %p129
      %p131 = scmp.ne.s32.totalorder %s119, %s120
      %p132 = scmp.eq.s32.totalorder %s33, 1
      %p133 = por %p131, %p132
      %p135 = scmp.ne.s32.totalorder %s120, %s134
      %p136 = scmp.eq.s32.totalorder %s33, 0
      %p137 = por %p135, %p136
      %s139 = sadd.s32 %s138, 1
      %p142 = scmp.eq.s32.totalorder %s27, 1
      %p143 = scmp.ne.s32.totalorder %s138, %s140
      %p144 = scmp.eq.s32.totalorder %s27, 0
      %p145 = por %p143, %p144
      %p146 = scmp.ne.s32.totalorder %s138, %s140
      %p147 = scmp.eq.s32.totalorder %s32, 1
      %p148 = por %p146, %p147
      %p149 = scmp.ne.s32.totalorder %s140, %s141
      %p150 = scmp.eq.s32.totalorder %s32, 0
      %p151 = por %p149, %p150
      %p152 = scmp.ne.s32.totalorder %s140, %s141
      %p153 = scmp.eq.s32.totalorder %s33, 1
      %p154 = por %p152, %p153
      %p156 = scmp.ne.s32.totalorder %s141, %s155
      %p157 = scmp.eq.s32.totalorder %s33, 0
      %p158 = por %p156, %p157
      %s160 = sadd.s32 %s159, 1
      %p163 = scmp.eq.s32.totalorder %s27, 1
      %p164 = scmp.ne.s32.totalorder %s159, %s161
      %p165 = scmp.eq.s32.totalorder %s27, 0
      %p166 = por %p164, %p165
      %p167 = scmp.ne.s32.totalorder %s159, %s161
      %p168 = scmp.eq.s32.totalorder %s32, 1
      %p169 = por %p167, %p168
      %p170 = scmp.ne.s32.totalorder %s161, %s162
      %p171 = scmp.eq.s32.totalorder %s32, 0
      %p172 = por %p170, %p171
      %p173 = scmp.ne.s32.totalorder %s161, %s162
      %p174 = scmp.eq.s32.totalorder %s33, 1
      %p175 = por %p173, %p174
      %p177 = scmp.ne.s32.totalorder %s162, %s176
      %p178 = scmp.eq.s32.totalorder %s33, 0
      %p179 = por %p177, %p178
      %s181 = sadd.s32 %s180, 1
      %p184 = scmp.eq.s32.totalorder %s27, 1
      %p185 = scmp.ne.s32.totalorder %s180, %s182
      %p186 = scmp.eq.s32.totalorder %s27, 0
      %p187 = por %p185, %p186
      %p188 = scmp.ne.s32.totalorder %s180, %s182
      %p189 = scmp.eq.s32.totalorder %s32, 1
      %p190 = por %p188, %p189
      %p191 = scmp.ne.s32.totalorder %s182, %s183
      %p192 = scmp.eq.s32.totalorder %s32, 0
      %p193 = por %p191, %p192
      %p194 = scmp.ne.s32.totalorder %s182, %s183
      %p195 = scmp.eq.s32.totalorder %s33, 1
      %p196 = por %p194, %p195
      %p198 = scmp.ne.s32.totalorder %s183, %s197
      %p199 = scmp.eq.s32.totalorder %s33, 0
      %p200 = por %p198, %p199
      %s201 = sadd.s32 %s34, %s35
      %s202 = sadd.s32 %s46, %s42
      %s203 = ssub.s32 %s201, %s202
      %p204 = scmp.eq.s32.totalorder %s203, 0
      %s206 = sadd.s32 %s205, 1
      %s207 = scalar_select %p204, %s205, %s206
      %p210 = pneg %p204
      %p211 = scmp.eq.s32.totalorder %s27, 1
      %p212 = por %p210, %p211
      %p213 = scmp.ne.s32.totalorder %s205, %s208
      %p214 = scmp.eq.s32.totalorder %s27, 0
      %p215 = por %p213, %p214
      %p216 = scmp.ne.s32.totalorder %s205, %s208
      %p217 = scmp.eq.s32.totalorder %s32, 1
      %p218 = por %p216, %p217
      %p219 = scmp.ne.s32.totalorder %s208, %s209
      %p220 = scmp.eq.s32.totalorder %s32, 0
      %p221 = por %p219, %p220
      %p222 = scmp.ne.s32.totalorder %s208, %s209
      %p223 = scmp.eq.s32.totalorder %s33, 1
      %p224 = por %p222, %p223
      %p226 = scmp.ne.s32.totalorder %s209, %s225
      %p227 = scmp.eq.s32.totalorder %s33, 0
      %p228 = por %p226, %p227
      %s229 = sadd.s32 %s34, %s35
      %s230 = sadd.s32 %s46, %s42
      %s231 = ssub.s32 %s229, %s230
      %p232 = scmp.eq.s32.totalorder %s231, 0
      %s234 = sadd.s32 %s233, 1
      %s235 = scalar_select %p232, %s233, %s234
      %p238 = pneg %p232
      %p239 = scmp.eq.s32.totalorder %s27, 1
      %p240 = por %p238, %p239
      %p241 = scmp.ne.s32.totalorder %s233, %s236
      %p242 = scmp.eq.s32.totalorder %s27, 0
      %p243 = por %p241, %p242
      %p244 = scmp.ne.s32.totalorder %s233, %s236
      %p245 = scmp.eq.s32.totalorder %s32, 1
      %p246 = por %p244, %p245
      %p247 = scmp.ne.s32.totalorder %s236, %s237
      %p248 = scmp.eq.s32.totalorder %s32, 0
      %p249 = por %p247, %p248
      %p250 = scmp.ne.s32.totalorder %s236, %s237
      %p251 = scmp.eq.s32.totalorder %s33, 1
      %p252 = por %p250, %p251
      %p254 = scmp.ne.s32.totalorder %s237, %s253
      %p255 = scmp.eq.s32.totalorder %s33, 0
      %p256 = por %p254, %p255
      %p257 = scmp.le.s32.totalorder 1, %s27
      %p258 = scmp.lt.s32.totalorder %s27, 3
      %p259 = pnand %p257, %p258
      %p260 = pneg %p259
      // Predicated region
      $region9: #{tpu_custom_call.1} parent=5 // pred_check
        _
      $region10: #{tpu_custom_call.1} parent=5 // pred_check_branch
        %262 = sbr.rel (%p259) target = $region12
      $region11: #{tpu_custom_call.1} parent=5 // pred_region
        %s263 = ssub.s32 %s27, 1
        // Predicated region
        $region13: #{tpu_custom_call.1} parent=11 // pred_check
          %p264 = pneg %p88
        $region14: #{tpu_custom_call.1} parent=11 // pred_check_branch
          %266 = sbr.rel (%p264) target = $region16
        $region15: #{tpu_custom_call.1} parent=11 // pred_region
          %s268 = ssub.s32 16, 16
          %269 = vsyncadd [#allocation6], %s268
          %s271 = sshll.u32 [#allocation5], 4
          %s272 = int_to_ptr.vmem [resolvable:$true] %s271
          %274 = dma.hbm_to_vmem [thread:$0]  %s1, 16, %s272, [#allocation6]
        $region16: #{tpu_custom_call.1} parent=11 // pred_fallthru
          _
        // Predicated region
        $region17: #{tpu_custom_call.1} parent=11 // pred_check
          %p275 = pneg %p109
        $region18: #{tpu_custom_call.1} parent=11 // pred_check_branch
          %277 = sbr.rel (%p275) target = $region20
        $region19: #{tpu_custom_call.1} parent=11 // pred_region
          %s279 = ssub.s32 16, 16
          %280 = vsyncadd [#allocation6], %s279
          %s282 = sshll.u32 [#allocation7], 4
          %s283 = int_to_ptr.vmem [resolvable:$true] %s282
          %285 = dma.hbm_to_vmem [thread:$0]  %s2, 16, %s283, [#allocation6]
        $region20: #{tpu_custom_call.1} parent=11 // pred_fallthru
          _
        // Predicated region
        $region21: #{tpu_custom_call.1} parent=11 // pred_check
          %p286 = pneg %p130
        $region22: #{tpu_custom_call.1} parent=11 // pred_check_branch
          %288 = sbr.rel (%p286) target = $region24
        $region23: #{tpu_custom_call.1} parent=11 // pred_region
          %s290 = ssub.s32 256, 256
          %291 = vsyncadd [#allocation9], %s290
          %s292 = sshll.u32 [#allocation8], 4
          %s293 = int_to_ptr.vmem [resolvable:$true] %s292
          %298 = dma.hbm_to_vmem [thread:$0]  %s3, 256, %s293, [#allocation9], 64, 64, 4
        $region24: #{tpu_custom_call.1} parent=11 // pred_fallthru
          _
        // Predicated region
        $region25: #{tpu_custom_call.1} parent=11 // pred_check
          %p299 = pneg %p151
        $region26: #{tpu_custom_call.1} parent=11 // pred_check_branch
          %301 = sbr.rel (%p299) target = $region28
        $region27: #{tpu_custom_call.1} parent=11 // pred_region
          %s303 = ssub.s32 16, 16
          %304 = vsyncadd [#allocation9], %s303
          %s306 = sshll.u32 [#allocation10], 4
          %s307 = int_to_ptr.vmem [resolvable:$true] %s306
          %309 = dma.hbm_to_vmem [thread:$0]  %s4, 16, %s307, [#allocation9]
        $region28: #{tpu_custom_call.1} parent=11 // pred_fallthru
          _
        // Predicated region
        $region29: #{tpu_custom_call.1} parent=11 // pred_check
          %p310 = pneg %p172
        $region30: #{tpu_custom_call.1} parent=11 // pred_check_branch
          %312 = sbr.rel (%p310) target = $region32
        $region31: #{tpu_custom_call.1} parent=11 // pred_region
          %s314 = ssub.s32 256, 256
          %315 = vsyncadd [#allocation12], %s314
          %s316 = sshll.u32 [#allocation11], 4
          %s317 = int_to_ptr.vmem [resolvable:$true] %s316
          %322 = dma.hbm_to_vmem [thread:$0]  %s5, 256, %s317, [#allocation12], 64, 64, 4
        $region32: #{tpu_custom_call.1} parent=11 // pred_fallthru
          _
        // Predicated region
        $region33: #{tpu_custom_call.1} parent=11 // pred_check
          %p323 = pneg %p193
        $region34: #{tpu_custom_call.1} parent=11 // pred_check_branch
          %325 = sbr.rel (%p323) target = $region36
        $region35: #{tpu_custom_call.1} parent=11 // pred_region
          %s327 = ssub.s32 16, 16
          %328 = vsyncadd [#allocation12], %s327
          %s330 = sshll.u32 [#allocation13], 4
          %s331 = int_to_ptr.vmem [resolvable:$true] %s330
          %333 = dma.hbm_to_vmem [thread:$0]  %s6, 16, %s331, [#allocation12]
        $region36: #{tpu_custom_call.1} parent=11 // pred_fallthru
          _
      $region12: #{tpu_custom_call.1} parent=5 // pred_fallthru
        _
      %p334 = scmp.lt.s32.totalorder %s27, 2
      // Predicated region
      $region37: #{tpu_custom_call.1} parent=5 // pred_check
        %p335 = pneg %p334
      $region38: #{tpu_custom_call.1} parent=5 // pred_check_branch
        %337 = sbr.rel (%p335) target = $region40
      $region39: #{tpu_custom_call.1} parent=5 // pred_region
        // Predicated region
        $region41: #{tpu_custom_call.1} parent=39 // pred_check
          %p338 = pneg %p61
        $region42: #{tpu_custom_call.1} parent=39 // pred_check_branch
          %340 = sbr.rel (%p338) target = $region44
        $region43: #{tpu_custom_call.1} parent=39 // pred_region
          %s341 = sand.u32 %s51, 1
          %s342 = scalar_lea.sflag [#allocation3], %s341
          %s343 = sand.u32 %s51, 1
          %s344 = smul.addr %s343, 8
          %s345 = scalar_lea.vmem [#allocation2], %s344
          %s347 = ssub.s32 128, 128
          %348 = vsyncadd %s342, %s347
          %s349 = sadd.s32 %s35, %s34
          %s350 = smul.addr %s349, 128
          %s351 = scalar_lea.hbm %s0, %s350
          %s353 = sshll.u32 %s345, 4
          %s354 = int_to_ptr.vmem [resolvable:$true] %s353
          %356 = dma.hbm_to_vmem [thread:$0]  %s351, 128, %s354, %s342
        $region44: #{tpu_custom_call.1} parent=39 // pred_fallthru
          _
      $region40: #{tpu_custom_call.1} parent=5 // pred_fallthru
        _
      %p357 = scmp.le.s32.totalorder 1, %s27
      %p358 = scmp.lt.s32.totalorder %s27, 3
      %p359 = pnand %p357, %p358
      %p360 = pneg %p359
      // Predicated region
      $region45: #{tpu_custom_call.1} parent=5 // pred_check
        _
      $region46: #{tpu_custom_call.1} parent=5 // pred_check_branch
        %362 = sbr.rel (%p359) target = $region48
      $region47: #{tpu_custom_call.1} parent=5 // pred_region
        %s363 = ssub.s32 %s27, 1
        %s364 = sand.u32 %s54, 1
        %s365 = scalar_lea.sflag [#allocation3], %s364
        %s366 = sand.u32 %s54, 1
        %s367 = smul.addr %s366, 8
        %s368 = scalar_lea.vmem [#allocation2], %s367
        // Predicated region
        $region49: #{tpu_custom_call.1} parent=47 // pred_check
          %p369 = pneg %p67
        $region50: #{tpu_custom_call.1} parent=47 // pred_check_branch
          %371 = sbr.rel (%p369) target = $region52
        $region51: #{tpu_custom_call.1} parent=47 // pred_region
          %372 = dma.done %s365, 128
        $region52: #{tpu_custom_call.1} parent=47 // pred_fallthru
          _
        // Predicated region
        $region53: #{tpu_custom_call.1} parent=47 // pred_check
          %p373 = pneg %p88
        $region54: #{tpu_custom_call.1} parent=47 // pred_check_branch
          %375 = sbr.rel (%p373) target = $region56
        $region55: #{tpu_custom_call.1} parent=47 // pred_region
          %376 = dma.done [#allocation6], 16
        $region56: #{tpu_custom_call.1} parent=47 // pred_fallthru
          _
        // Predicated region
        $region57: #{tpu_custom_call.1} parent=47 // pred_check
          %p377 = pneg %p109
        $region58: #{tpu_custom_call.1} parent=47 // pred_check_branch
          %379 = sbr.rel (%p377) target = $region60
        $region59: #{tpu_custom_call.1} parent=47 // pred_region
          %380 = dma.done [#allocation6], 16
        $region60: #{tpu_custom_call.1} parent=47 // pred_fallthru
          _
        // Predicated region
        $region61: #{tpu_custom_call.1} parent=47 // pred_check
          %p381 = pneg %p130
        $region62: #{tpu_custom_call.1} parent=47 // pred_check_branch
          %383 = sbr.rel (%p381) target = $region64
        $region63: #{tpu_custom_call.1} parent=47 // pred_region
          %384 = dma.done [#allocation9], 256
        $region64: #{tpu_custom_call.1} parent=47 // pred_fallthru
          _
        // Predicated region
        $region65: #{tpu_custom_call.1} parent=47 // pred_check
          %p385 = pneg %p151
        $region66: #{tpu_custom_call.1} parent=47 // pred_check_branch
          %387 = sbr.rel (%p385) target = $region68
        $region67: #{tpu_custom_call.1} parent=47 // pred_region
          %388 = dma.done [#allocation9], 16
        $region68: #{tpu_custom_call.1} parent=47 // pred_fallthru
          _
        // Predicated region
        $region69: #{tpu_custom_call.1} parent=47 // pred_check
          %p389 = pneg %p172
        $region70: #{tpu_custom_call.1} parent=47 // pred_check_branch
          %391 = sbr.rel (%p389) target = $region72
        $region71: #{tpu_custom_call.1} parent=47 // pred_region
          %392 = dma.done [#allocation12], 256
        $region72: #{tpu_custom_call.1} parent=47 // pred_fallthru
          _
        // Predicated region
        $region73: #{tpu_custom_call.1} parent=47 // pred_check
          %p393 = pneg %p193
        $region74: #{tpu_custom_call.1} parent=47 // pred_check_branch
          %395 = sbr.rel (%p393) target = $region76
        $region75: #{tpu_custom_call.1} parent=47 // pred_region
          %396 = dma.done [#allocation12], 16
        $region76: #{tpu_custom_call.1} parent=47 // pred_fallthru
          _
        %s397 = sand.u32 %s54, 1
        %s398 = scalar_lea.sflag [#allocation3], %s397
        %s399 = sand.u32 %s54, 1
        %s400 = smul.addr %s399, 8
        %s401 = scalar_lea.vmem [#allocation2], %s400
        %p402 = pneg %p67
        %p403 = pneg %p64
        %p404 = pneg %p88
        %p405 = pneg %p85
        %p406 = pneg %p109
        %p407 = pneg %p106
        %p408 = pneg %p130
        %p409 = pneg %p127
        %p410 = pneg %p151
        %p411 = pneg %p148
        %p412 = pneg %p172
        %p413 = pneg %p169
        %p414 = pneg %p193
        %p415 = pneg %p190
        %p416 = pneg %p221
        %p417 = pneg %p218
        %s418 = sand.u32 %s208, 1
        %s419 = scalar_lea.sflag [#allocation4], %s418
        %s420 = sand.u32 %s208, 1
        %s421 = smul.addr %s420, 16
        %s422 = scalar_lea.vmem [#allocation14], %s421
        %p423 = pneg %p249
        %p424 = pneg %p246
        %s425 = sand.u32 %s236, 1
        %s426 = scalar_lea.sflag [#allocation16], %s425
        %s427 = sand.u32 %s236, 1
        %s428 = smul.addr %s427, 16
        %s429 = scalar_lea.vmem [#allocation15], %s428
        %s430 = sadd.s32 %s36, %s37
        %s431 = sadd.s32 %s36, %s37
        %v433 = vld [vmem:[%s368] sm:$0xff]
        %v434 = vld [vmem:[#allocation5] sm:$0x1]
        %v435 = vld [vmem:[#allocation7] sm:$0x1]
        %vm436 = vcmask 261120
        %v437 = vsel %vm436, %v433, 0.0
        %438 = vadd.xlane.f32.xlu0 %v437
        %v439 = vpop.xlane.xlu0 %438
        %v440 = vrcp.pop 32.0
        %v441 = vmul.f32 %v439, %v440
        %v442 = vsub.f32 %v433, %v441
        %v443 = vmul.f32 %v442, %v442
        %v444 = vsel %vm436, %v443, 0.0
        %445 = vadd.xlane.f32.xlu0 %v444
        %v446 = vpop.xlane.xlu0 %445
        %v447 = vmul.f32 %v446, %v440
        %v448 = vadd.f32 %v447, 1e-05
        %v449 = vrsqrt.pop %v448
        %v450 = vmul.f32 %v442, %v449
        %v452 = vlaneseq
        %v453 = vshrl.u32 %v452, 7
        %v454 = vsub.s32 0, %v453
        %v455 = vrot.slane %v434, %v454
        %v457 = vmul.f32 %v450, %v455
        %v459 = vlaneseq
        %v460 = vshrl.u32 %v459, 7
        %v461 = vsub.s32 0, %v460
        %v462 = vrot.slane %v435, %v461
        %v464 = vadd.f32 %v457, %v462
        %v465 = vpack.c.bf16 %v464, %v464
        %v466 = vld [vmem:[#allocation8] sm:$0xf]
        %v467 = vld [vmem:[#allocation8 + $0x4] sm:$0xf]
        %v468 = vld [vmem:[#allocation8 + $0x8] sm:$0xf]
        %v469 = vld [vmem:[#allocation8 + $0xc] sm:$0xf]
        %v470 = vld [vmem:[#allocation10] sm:$0x1]
        %v472 = vlaneseq
        %v473 = vshrl.u32 %v472, 7
        %v474 = vsub.s32 0, %v473
        %v475 = vrot.slane %v470, %v474
        %v481 = vunpack.c.l.b16 %v466
        %v482 = vunpack.c.l.b16 %v467
        %v483 = vunpack.c.l.b16 %v468
        %v484 = vunpack.c.l.b16 %v469
        %v485 = vpack.c.b16 %v482, %v481
        %v486 = vpack.c.b16 %v484, %v483
        %v490 = vsel %vm436, %v465, 0
        %492 = vmatprep.subr.bf16.mxu0 0
        %493 = vmatpush1.bf16.msra.mxu0 %v485
        %494 = vmatprep.subr.bf16.mxu0 0
        %495 = vmatpush1.bf16.msra.mxu0 %v486
        %496 = vmatprep.subr.bf16.mxu0 0
        %497 = vmatpush1.bf16.msra.mxu0 0
        %498 = vmatprep.subr.bf16.mxu0 0
        %499 = vmatpush1.bf16.msra.mxu0 0
        %500 = vmatprep.subr.bf16.mxu0 0
        %501 = vmatpush1.bf16.msra.mxu0 0
        %502 = vmatprep.subr.bf16.mxu0 0
        %503 = vmatpush1.bf16.msra.mxu0 0
        %504 = vmatprep.subr.bf16.mxu0 0
        %505 = vmatpush1.bf16.msra.mxu0 0
        %506 = vmatprep.subr.bf16.mxu0 0
        %507 = vmatpush1.bf16.msra.mxu0 0
        %508 = vmatprep.subr.bf16.mxu0 0
        %509 = vmatpush1.bf16.msra.mxu0 0
        %510 = vmatprep.subr.bf16.mxu0 0
        %511 = vmatpush1.bf16.msra.mxu0 0
        %512 = vmatprep.subr.bf16.mxu0 0
        %513 = vmatpush1.bf16.msra.mxu0 0
        %514 = vmatprep.subr.bf16.mxu0 0
        %515 = vmatpush1.bf16.msra.mxu0 0
        %516 = vmatprep.subr.bf16.mxu0 0
        %517 = vmatpush1.bf16.msra.mxu0 0
        %518 = vmatprep.subr.bf16.mxu0 0
        %519 = vmatpush1.bf16.msra.mxu0 0
        %520 = vmatprep.subr.bf16.mxu0 0
        %521 = vmatpush1.bf16.msra.mxu0 0
        %522 = vmatprep.subr.bf16.mxu0 0
        %523 = vmatpush1.bf16.msra.mxu0 0
        %524 = vmatprep.mubr.bf16.mxu0 0
        %525 = vmatmul.mubr.bf16.gmra.mrb[0].mxu0 %v490
        %v526 = vpop.f32.mrb[0].mxu0
        %v527 = vadd.f32 %v475, %v526
        %v528 = vpop.f32.mrb[0].mxu0
        %v529 = vpop.f32.mrb[0].mxu0
        %v530 = vpop.f32.mrb[0].mxu0
        %531 = vdwg.mxu0
        %v532 = vld [vmem:[#allocation11] sm:$0xf]
        %v533 = vld [vmem:[#allocation11 + $0x4] sm:$0xf]
        %v534 = vld [vmem:[#allocation11 + $0x8] sm:$0xf]
        %v535 = vld [vmem:[#allocation11 + $0xc] sm:$0xf]
        %v536 = vld [vmem:[#allocation13] sm:$0x1]
        %v538 = vlaneseq
        %v539 = vshrl.u32 %v538, 7
        %v540 = vsub.s32 0, %v539
        %v541 = vrot.slane %v536, %v540
        %v547 = vunpack.c.l.b16 %v532
        %v548 = vunpack.c.l.b16 %v533
        %v549 = vunpack.c.l.b16 %v534
        %v550 = vunpack.c.l.b16 %v535
        %v551 = vpack.c.b16 %v548, %v547
        %v552 = vpack.c.b16 %v550, %v549
        %555 = vmatprep.subr.bf16.mxu0 0
        %556 = vmatpush1.bf16.msra.mxu0 %v551
        %557 = vmatprep.subr.bf16.mxu0 0
        %558 = vmatpush1.bf16.msra.mxu0 %v552
        %559 = vmatprep.subr.bf16.mxu0 0
        %560 = vmatpush1.bf16.msra.mxu0 0
        %561 = vmatprep.subr.bf16.mxu0 0
        %562 = vmatpush1.bf16.msra.mxu0 0
        %563 = vmatprep.subr.bf16.mxu0 0
        %564 = vmatpush1.bf16.msra.mxu0 0
        %565 = vmatprep.subr.bf16.mxu0 0
        %566 = vmatpush1.bf16.msra.mxu0 0
        %567 = vmatprep.subr.bf16.mxu0 0
        %568 = vmatpush1.bf16.msra.mxu0 0
        %569 = vmatprep.subr.bf16.mxu0 0
        %570 = vmatpush1.bf16.msra.mxu0 0
        %571 = vmatprep.subr.bf16.mxu0 0
        %572 = vmatpush1.bf16.msra.mxu0 0
        %573 = vmatprep.subr.bf16.mxu0 0
        %574 = vmatpush1.bf16.msra.mxu0 0
        %575 = vmatprep.subr.bf16.mxu0 0
        %576 = vmatpush1.bf16.msra.mxu0 0
        %577 = vmatprep.subr.bf16.mxu0 0
        %578 = vmatpush1.bf16.msra.mxu0 0
        %579 = vmatprep.subr.bf16.mxu0 0
        %580 = vmatpush1.bf16.msra.mxu0 0
        %581 = vmatprep.subr.bf16.mxu0 0
        %582 = vmatpush1.bf16.msra.mxu0 0
        %583 = vmatprep.subr.bf16.mxu0 0
        %584 = vmatpush1.bf16.msra.mxu0 0
        %585 = vmatprep.subr.bf16.mxu0 0
        %586 = vmatpush1.bf16.msra.mxu0 0
        %587 = vmatprep.mubr.bf16.mxu0 0
        %588 = vmatmul.mubr.bf16.gmra.mrb[0].mxu0 %v490
        %v589 = vpop.f32.mrb[0].mxu0
        %v590 = vadd.f32 %v541, %v589
        %v591 = vpop.f32.mrb[0].mxu0
        %v592 = vpop.f32.mrb[0].mxu0
        %v593 = vpop.f32.mrb[0].mxu0
        %594 = vdwg.mxu0
        %v595 = vpack.c.bf16 %v527, %v527
        %597 = vrot.lane.b32.xlu0 %v595, 120
        %v598 = vpop.permute.xlu0 %597
        %599 = vrot.lane.b32.xlu0 %v595, 112
        %v600 = vpop.permute.xlu0 %599
        %601 = vrot.lane.b32.xlu0 %v595, 104
        %v602 = vpop.permute.xlu0 %601
        %v604 = vunpack.c.l.s4 1983009808
        %v605 = vunpack.c.0.s8 %v604
        %v606 = vlaneseq
        %v607 = vshrl.u32 %v606, 7
        %v608 = vsub.s32 %v605, %v607
        %v609 = vrot.slane %v595, %v608
        %v612 = vunpack.c.l.s4 1983009808
        %v613 = vunpack.c.0.s8 %v612
        %v614 = vlaneseq
        %v615 = vshrl.u32 %v614, 7
        %v616 = vsub.s32 %v613, %v615
        %v617 = vrot.slane %v600, %v616
        %v618 = vcombine.low %v609, %v617
        %v619 = vcombine.high %v609, %v617
        %v621 = vunpack.c.l.s4 1934713408
        %v622 = vunpack.c.0.s8 %v621
        %v623 = vlaneseq
        %v624 = vshrl.u32 %v623, 7
        %v625 = vsub.s32 %v622, %v624
        %v626 = vrot.slane %v618, %v625
        %v628 = vunpack.c.l.s4 1934713408
        %v629 = vunpack.c.0.s8 %v628
        %v630 = vlaneseq
        %v631 = vshrl.u32 %v630, 7
        %v632 = vsub.s32 %v629, %v631
        %v633 = vrot.slane %v619, %v632
        %v634 = vcombine.high %v626, 0
        %v635 = vcombine.high %v633, 0
        %v638 = vunpack.c.l.s4 1983009808
        %v639 = vunpack.c.0.s8 %v638
        %v640 = vlaneseq
        %v641 = vshrl.u32 %v640, 7
        %v642 = vsub.s32 %v639, %v641
        %v643 = vrot.slane %v598, %v642
        %v646 = vunpack.c.l.s4 1983009808
        %v647 = vunpack.c.0.s8 %v646
        %v648 = vlaneseq
        %v649 = vshrl.u32 %v648, 7
        %v650 = vsub.s32 %v647, %v649
        %v651 = vrot.slane %v602, %v650
        %v652 = vcombine.low %v643, %v651
        %v653 = vcombine.high %v643, %v651
        %v655 = vunpack.c.l.s4 1934713408
        %v656 = vunpack.c.0.s8 %v655
        %v657 = vlaneseq
        %v658 = vshrl.u32 %v657, 7
        %v659 = vsub.s32 %v656, %v658
        %v660 = vrot.slane %v652, %v659
        %v662 = vunpack.c.l.s4 1934713408
        %v663 = vunpack.c.0.s8 %v662
        %v664 = vlaneseq
        %v665 = vshrl.u32 %v664, 7
        %v666 = vsub.s32 %v663, %v665
        %v667 = vrot.slane %v653, %v666
        %v668 = vcombine.high %v660, 0
        %v669 = vcombine.high %v667, 0
        %v672 = vpack.i.b16 %v660, %v626
        %v674 = vshrl.u32 %v626, 16
        %v675 = vshrl.u32 %v660, 16
        %v676 = vpack.i.b16 %v675, %v674
        %v680 = vpack.i.b16 %v668, %v634
        %v682 = vshrl.u32 %v634, 16
        %v683 = vshrl.u32 %v668, 16
        %v684 = vpack.i.b16 %v683, %v682
        %v688 = vpack.i.b16 %v667, %v633
        %v690 = vshrl.u32 %v633, 16
        %v691 = vshrl.u32 %v667, 16
        %v692 = vpack.i.b16 %v691, %v690
        %v696 = vpack.i.b16 %v669, %v635
        %v698 = vshrl.u32 %v635, 16
        %v699 = vshrl.u32 %v669, 16
        %v700 = vpack.i.b16 %v699, %v698
        %v702 = vcombine.low %v672, %v688
        %v704 = vunpack.c.l.s4 1983009808
        %v705 = vunpack.c.0.s8 %v704
        %v706 = vlaneseq
        %v707 = vshrl.u32 %v706, 7
        %v708 = vsub.s32 %v705, %v707
        %v709 = vrot.slane %v702, %v708
        %v710 = vcombine.low %v680, %v696
        %v712 = vunpack.c.l.s4 1983009808
        %v713 = vunpack.c.0.s8 %v712
        %v714 = vlaneseq
        %v715 = vshrl.u32 %v714, 7
        %v716 = vsub.s32 %v713, %v715
        %v717 = vrot.slane %v710, %v716
        %v718 = vcombine.low %v709, %v717
        %v720 = vunpack.c.l.s4 1934713408
        %v721 = vunpack.c.0.s8 %v720
        %v722 = vlaneseq
        %v723 = vshrl.u32 %v722, 7
        %v724 = vsub.s32 %v721, %v723
        %v725 = vrot.slane %v718, %v724
        %v726 = vcombine.high %v725, 0
        %v727 = vcombine.low %v676, %v692
        %v729 = vunpack.c.l.s4 1983009808
        %v730 = vunpack.c.0.s8 %v729
        %v731 = vlaneseq
        %v732 = vshrl.u32 %v731, 7
        %v733 = vsub.s32 %v730, %v732
        %v734 = vrot.slane %v727, %v733
        %v735 = vcombine.low %v684, %v700
        %v737 = vunpack.c.l.s4 1983009808
        %v738 = vunpack.c.0.s8 %v737
        %v739 = vlaneseq
        %v740 = vshrl.u32 %v739, 7
        %v741 = vsub.s32 %v738, %v740
        %v742 = vrot.slane %v735, %v741
        %v743 = vcombine.low %v734, %v742
        %v745 = vunpack.c.l.s4 1934713408
        %v746 = vunpack.c.0.s8 %v745
        %v747 = vlaneseq
        %v748 = vshrl.u32 %v747, 7
        %v749 = vsub.s32 %v746, %v748
        %v750 = vrot.slane %v743, %v749
        %v751 = vcombine.high %v750, 0
        %v754 = vpack.i.b16 %v750, %v725
        %v756 = vshrl.u32 %v725, 16
        %v757 = vshrl.u32 %v750, 16
        %v758 = vpack.i.b16 %v757, %v756
        %v762 = vpack.i.b16 %v751, %v726
        %v764 = vshrl.u32 %v726, 16
        %v765 = vshrl.u32 %v751, 16
        %v766 = vpack.i.b16 %v765, %v764
        %vm768 = vcmask 60416
        %769 = vst.msk [vmem:[%s422] sm:$0xf] %vm768, %v754
        %770 = vst.msk [vmem:[%s422 + $0x4] sm:$0xf] %vm768, %v758
        %771 = vst.msk [vmem:[%s422 + $0x8] sm:$0xf] %vm768, %v762
        %772 = vst.msk [vmem:[%s422 + $0xc] sm:$0xf] %vm768, %v766
        %v773 = vpack.c.bf16 %v590, %v590
        %775 = vrot.lane.b32.xlu0 %v773, 120
        %v776 = vpop.permute.xlu0 %775
        %777 = vrot.lane.b32.xlu0 %v773, 112
        %v778 = vpop.permute.xlu0 %777
        %779 = vrot.lane.b32.xlu0 %v773, 104
        %v780 = vpop.permute.xlu0 %779
        %v782 = vunpack.c.l.s4 1983009808
        %v783 = vunpack.c.0.s8 %v782
        %v784 = vlaneseq
        %v785 = vshrl.u32 %v784, 7
        %v786 = vsub.s32 %v783, %v785
        %v787 = vrot.slane %v773, %v786
        %v790 = vunpack.c.l.s4 1983009808
        %v791 = vunpack.c.0.s8 %v790
        %v792 = vlaneseq
        %v793 = vshrl.u32 %v792, 7
        %v794 = vsub.s32 %v791, %v793
        %v795 = vrot.slane %v778, %v794
        %v796 = vcombine.low %v787, %v795
        %v797 = vcombine.high %v787, %v795
        %v799 = vunpack.c.l.s4 1934713408
        %v800 = vunpack.c.0.s8 %v799
        %v801 = vlaneseq
        %v802 = vshrl.u32 %v801, 7
        %v803 = vsub.s32 %v800, %v802
        %v804 = vrot.slane %v796, %v803
        %v806 = vunpack.c.l.s4 1934713408
        %v807 = vunpack.c.0.s8 %v806
        %v808 = vlaneseq
        %v809 = vshrl.u32 %v808, 7
        %v810 = vsub.s32 %v807, %v809
        %v811 = vrot.slane %v797, %v810
        %v812 = vcombine.high %v804, 0
        %v813 = vcombine.high %v811, 0
        %v816 = vunpack.c.l.s4 1983009808
        %v817 = vunpack.c.0.s8 %v816
        %v818 = vlaneseq
        %v819 = vshrl.u32 %v818, 7
        %v820 = vsub.s32 %v817, %v819
        %v821 = vrot.slane %v776, %v820
        %v824 = vunpack.c.l.s4 1983009808
        %v825 = vunpack.c.0.s8 %v824
        %v826 = vlaneseq
        %v827 = vshrl.u32 %v826, 7
        %v828 = vsub.s32 %v825, %v827
        %v829 = vrot.slane %v780, %v828
        %v830 = vcombine.low %v821, %v829
        %v831 = vcombine.high %v821, %v829
        %v833 = vunpack.c.l.s4 1934713408
        %v834 = vunpack.c.0.s8 %v833
        %v835 = vlaneseq
        %v836 = vshrl.u32 %v835, 7
        %v837 = vsub.s32 %v834, %v836
        %v838 = vrot.slane %v830, %v837
        %v840 = vunpack.c.l.s4 1934713408
        %v841 = vunpack.c.0.s8 %v840
        %v842 = vlaneseq
        %v843 = vshrl.u32 %v842, 7
        %v844 = vsub.s32 %v841, %v843
        %v845 = vrot.slane %v831, %v844
        %v846 = vcombine.high %v838, 0
        %v847 = vcombine.high %v845, 0
        %v850 = vpack.i.b16 %v838, %v804
        %v852 = vshrl.u32 %v804, 16
        %v853 = vshrl.u32 %v838, 16
        %v854 = vpack.i.b16 %v853, %v852
        %v858 = vpack.i.b16 %v846, %v812
        %v860 = vshrl.u32 %v812, 16
        %v861 = vshrl.u32 %v846, 16
        %v862 = vpack.i.b16 %v861, %v860
        %v866 = vpack.i.b16 %v845, %v811
        %v868 = vshrl.u32 %v811, 16
        %v869 = vshrl.u32 %v845, 16
        %v870 = vpack.i.b16 %v869, %v868
        %v874 = vpack.i.b16 %v847, %v813
        %v876 = vshrl.u32 %v813, 16
        %v877 = vshrl.u32 %v847, 16
        %v878 = vpack.i.b16 %v877, %v876
        %v880 = vcombine.low %v850, %v866
        %v882 = vunpack.c.l.s4 1983009808
        %v883 = vunpack.c.0.s8 %v882
        %v884 = vlaneseq
        %v885 = vshrl.u32 %v884, 7
        %v886 = vsub.s32 %v883, %v885
        %v887 = vrot.slane %v880, %v886
        %v888 = vcombine.low %v858, %v874
        %v890 = vunpack.c.l.s4 1983009808
        %v891 = vunpack.c.0.s8 %v890
        %v892 = vlaneseq
        %v893 = vshrl.u32 %v892, 7
        %v894 = vsub.s32 %v891, %v893
        %v895 = vrot.slane %v888, %v894
        %v896 = vcombine.low %v887, %v895
        %v898 = vunpack.c.l.s4 1934713408
        %v899 = vunpack.c.0.s8 %v898
        %v900 = vlaneseq
        %v901 = vshrl.u32 %v900, 7
        %v902 = vsub.s32 %v899, %v901
        %v903 = vrot.slane %v896, %v902
        %v904 = vcombine.high %v903, 0
        %v905 = vcombine.low %v854, %v870
        %v907 = vunpack.c.l.s4 1983009808
        %v908 = vunpack.c.0.s8 %v907
        %v909 = vlaneseq
        %v910 = vshrl.u32 %v909, 7
        %v911 = vsub.s32 %v908, %v910
        %v912 = vrot.slane %v905, %v911
        %v913 = vcombine.low %v862, %v878
        %v915 = vunpack.c.l.s4 1983009808
        %v916 = vunpack.c.0.s8 %v915
        %v917 = vlaneseq
        %v918 = vshrl.u32 %v917, 7
        %v919 = vsub.s32 %v916, %v918
        %v920 = vrot.slane %v913, %v919
        %v921 = vcombine.low %v912, %v920
        %v923 = vunpack.c.l.s4 1934713408
        %v924 = vunpack.c.0.s8 %v923
        %v925 = vlaneseq
        %v926 = vshrl.u32 %v925, 7
        %v927 = vsub.s32 %v924, %v926
        %v928 = vrot.slane %v921, %v927
        %v929 = vcombine.high %v928, 0
        %v932 = vpack.i.b16 %v928, %v903
        %v934 = vshrl.u32 %v903, 16
        %v935 = vshrl.u32 %v928, 16
        %v936 = vpack.i.b16 %v935, %v934
        %v940 = vpack.i.b16 %v929, %v904
        %v942 = vshrl.u32 %v904, 16
        %v943 = vshrl.u32 %v929, 16
        %v944 = vpack.i.b16 %v943, %v942
        %946 = vst.msk [vmem:[%s429] sm:$0xf] %vm768, %v932
        %947 = vst.msk [vmem:[%s429 + $0x4] sm:$0xf] %vm768, %v936
        %948 = vst.msk [vmem:[%s429 + $0x8] sm:$0xf] %vm768, %v940
        %949 = vst.msk [vmem:[%s429 + $0xc] sm:$0xf] %vm768, %v944
        %s950 = sand.u32 %s208, 1
        %s951 = scalar_lea.sflag [#allocation4], %s950
        %s952 = sand.u32 %s208, 1
        %s953 = smul.addr %s952, 16
        %s954 = scalar_lea.vmem [#allocation14], %s953
        %s955 = sand.u32 %s236, 1
        %s956 = scalar_lea.sflag [#allocation16], %s955
        %s957 = sand.u32 %s236, 1
        %s958 = smul.addr %s957, 16
        %s959 = scalar_lea.vmem [#allocation15], %s958
        // Predicated region
        $region77: #{tpu_custom_call.1} parent=47 // pred_check
          %p960 = pneg %p218
        $region78: #{tpu_custom_call.1} parent=47 // pred_check_branch
          %962 = sbr.rel (%p960) target = $region80
        $region79: #{tpu_custom_call.1} parent=47 // pred_region
          %s963 = sadd.s32 %s36, %s37
          %s965 = ssub.s32 256, 256
          %966 = vsyncadd %s951, %s965
          %s967 = smul.addr %s963, 4
          %s968 = smul.addr %s967, 64
          %s969 = scalar_lea.hbm %s7, %s968
          %s970 = sshll.u32 %s954, 4
          %s971 = int_to_ptr.vmem [resolvable:$true] %s970
          %976 = dma.vmem_to_hbm [thread:$0]  %s971, 256, %s969, %s951, 64, 64, 4
        $region80: #{tpu_custom_call.1} parent=47 // pred_fallthru
          _
        // Predicated region
        $region81: #{tpu_custom_call.1} parent=47 // pred_check
          %p977 = pneg %p246
        $region82: #{tpu_custom_call.1} parent=47 // pred_check_branch
          %979 = sbr.rel (%p977) target = $region84
        $region83: #{tpu_custom_call.1} parent=47 // pred_region
          %s980 = sadd.s32 %s36, %s37
          %s982 = ssub.s32 256, 256
          %983 = vsyncadd %s956, %s982
          %s984 = smul.addr %s980, 4
          %s985 = smul.addr %s984, 64
          %s986 = scalar_lea.hbm %s8, %s985
          %s987 = sshll.u32 %s959, 4
          %s988 = int_to_ptr.vmem [resolvable:$true] %s987
          %993 = dma.vmem_to_hbm [thread:$0]  %s988, 256, %s986, %s956, 64, 64, 4
        $region84: #{tpu_custom_call.1} parent=47 // pred_fallthru
          _
      $region48: #{tpu_custom_call.1} parent=5 // pred_fallthru
        _
      %p994 = scmp.le.s32.totalorder 2, %s27
      // Predicated region
      $region85: #{tpu_custom_call.1} parent=5 // pred_check
        %p995 = pneg %p994
      $region86: #{tpu_custom_call.1} parent=5 // pred_check_branch
        %997 = sbr.rel (%p995) target = $region88
      $region87: #{tpu_custom_call.1} parent=5 // pred_region
        %s998 = ssub.s32 %s27, 2
        // Predicated region
        $region89: #{tpu_custom_call.1} parent=87 // pred_check
          %p999 = pneg %p224
        $region90: #{tpu_custom_call.1} parent=87 // pred_check_branch
          %1001 = sbr.rel (%p999) target = $region92
        $region91: #{tpu_custom_call.1} parent=87 // pred_region
          %s1002 = sand.u32 %s209, 1
          %s1003 = scalar_lea.sflag [#allocation4], %s1002
          %s1004 = sand.u32 %s209, 1
          %s1005 = smul.addr %s1004, 16
          %s1006 = scalar_lea.vmem [#allocation14], %s1005
          %1007 = dma.done %s1003, 256
        $region92: #{tpu_custom_call.1} parent=87 // pred_fallthru
          _
        // Predicated region
        $region93: #{tpu_custom_call.1} parent=87 // pred_check
          %p1008 = pneg %p252
        $region94: #{tpu_custom_call.1} parent=87 // pred_check_branch
          %1010 = sbr.rel (%p1008) target = $region96
        $region95: #{tpu_custom_call.1} parent=87 // pred_region
          %s1011 = sand.u32 %s237, 1
          %s1012 = scalar_lea.sflag [#allocation16], %s1011
          %s1013 = sand.u32 %s237, 1
          %s1014 = smul.addr %s1013, 16
          %s1015 = scalar_lea.vmem [#allocation15], %s1014
          %1016 = dma.done %s1012, 256
        $region96: #{tpu_custom_call.1} parent=87 // pred_fallthru
          _
      $region88: #{tpu_custom_call.1} parent=5 // pred_fallthru
        _
    $region6: #{tpu_custom_call.1} parent=1 // loop_footer
      %s31 = sadd.s32 1, %s27
    $region7: #{tpu_custom_call.1} parent=1 // loop_footer_branch
      %26 = sbr.rel target = $region3
    $region8: #{tpu_custom_call.1} parent=1 // loop_exit
      _
    %1017 = vsyncpa [#allocation3], 1
    %s1018 = scalar_lea.sflag [#allocation3], 1
    %1019 = vsyncpa %s1018, 1
    %1020 = vsyncpa [#allocation6], 1
    %1021 = vsyncpa [#allocation9], 1
    %1022 = vsyncpa [#allocation12], 1
    %1023 = vsyncpa [#allocation4], 1
    %s1024 = scalar_lea.sflag [#allocation4], 1
    %1025 = vsyncpa %s1024, 1
    %1026 = vsyncpa [#allocation16], 1
    %s1027 = scalar_lea.sflag [#allocation16], 1
    %1028 = vsyncpa %s1027, 1

</llo_original>
